<compile_context>
chip_gen: v5e
topology: v5e:2x2
jax: 0.10.0
libtpu: 0.0.40
codegen_flags: <defaults>
</compile_context>

<pallas_src>
import functools

import jax
import jax.numpy as jnp
from jax.experimental import pallas as pl
from jax.experimental.pallas import tpu as pltpu


def _round_up(v, m):
    return ((v + m - 1) // m) * m


def _intent_kernel(x_ref, w1_ref, b1_ref, w2_ref, b2_ref, o_ref):
    # fc1 + ReLU.  Cast the streamed x tile in-kernel (no wrapper-side copy);
    # MXU accumulates in f32, bias/elementwise math stays f32.
    x = x_ref[...].astype(w1_ref.dtype)
    h = jnp.dot(x, w1_ref[...], preferred_element_type=jnp.float32)
    h = jnp.maximum(h + b1_ref[...], 0.0)            # (tm, 128) lane-dense

    # fc2 (hidden padded to 128 -> MXU-native K=128 contraction).
    logits = jnp.dot(h.astype(w2_ref.dtype), w2_ref[...],
                     preferred_element_type=jnp.float32) + b2_ref[...]

    # Softmax over the lane-dense, 128-padded class axis.  Padded lanes carry a
    # -1e9 bias, so exp() drives them to exactly 0 and the result is exact.
    m = jnp.max(logits, axis=-1, keepdims=True)
    e = jnp.exp(logits - m)
    denom = jnp.sum(e, axis=-1, keepdims=True)
    # Exact division (NOT approx reciprocal) so rows sum to 1 within f32 eps.
    o_ref[...] = (e / denom).astype(o_ref.dtype)


@functools.partial(jax.jit, static_argnames=("block_rows", "compute_dtype", "out_dtype"))
def intent_classifier_forward(x, w1, b1, w2, b2, *, block_rows=4096,
                              compute_dtype=None, out_dtype=jnp.bfloat16):
    """x: (B, input_size); w1: (input_size, 8); b1: (8,); w2: (8, C); b2: (C,).

    Returns softmax probabilities of shape (B, C) in `out_dtype`.
    """
    B, D_in = x.shape
    H = w1.shape[1]
    C = w2.shape[1]

    H_pad = _round_up(H, 128)   # lane-dense hidden activation
    C_pad = _round_up(C, 128)   # lane-dense class axis

    w_dtype = compute_dtype if compute_dtype is not None else w1.dtype

    # Zero-padded hidden columns: pad lanes of h are relu(0 + 0) = 0 and hit
    # zero rows of w2p, so the padding is exact.  Biases stay f32.
    w1p = jnp.zeros((D_in, H_pad), dtype=w_dtype).at[:, :H].set(w1.astype(w_dtype))
    b1p = jnp.zeros((1, H_pad), dtype=jnp.float32).at[:, :H].set(
        b1.reshape(1, H).astype(jnp.float32))
    w2p = jnp.zeros((H_pad, C_pad), dtype=w_dtype).at[:H, :C].set(w2.astype(w_dtype))
    b2p = jnp.full((1, C_pad), -1e9, dtype=jnp.float32).at[:, :C].set(
        b2.reshape(1, C).astype(jnp.float32))

    # Batch tile: multiple of 8, <= block_rows, and capped at ceil(B/2) rounded
    # up to 8 so large batches always produce >=2 grid steps (v7x dual-TC).
    half = -(-B // 2)
    tm = min(int(block_rows), _round_up(half, 8))
    tm = max(8, (tm // 8) * 8)
    num_tiles = pl.cdiv(B, tm)   # no jnp.pad copy; Pallas masks the ragged tail

    out = pl.pallas_call(
        _intent_kernel,
        out_shape=jax.ShapeDtypeStruct((B, C_pad), out_dtype),
        grid=(num_tiles,),
        in_specs=[
            pl.BlockSpec((tm, D_in), lambda i: (i, 0)),       # streamed x tile
            pl.BlockSpec((D_in, H_pad), lambda i: (0, 0)),    # VMEM-resident weights
            pl.BlockSpec((1, H_pad), lambda i: (0, 0)),
            pl.BlockSpec((H_pad, C_pad), lambda i: (0, 0)),
            pl.BlockSpec((1, C_pad), lambda i: (0, 0)),
        ],
        out_specs=pl.BlockSpec((tm, C_pad), lambda i: (i, 0)),
        compiler_params=pltpu.CompilerParams(
            dimension_semantics=("parallel",)),
    )(x, w1p, b1p, w2p, b2p)

    # TODO(synk): the column slice back to C classes is one extra pass over the
    # (B, 128) buffer; an argmax-only output variant would remove it entirely.
    return out[:, :C]


def reference_forward(x, w1, b1, w2, b2):
    h = jnp.maximum(x @ w1 + b1.reshape(1, -1), 0.0)
    logits = h @ w2 + b2.reshape(1, -1)
    return jax.nn.softmax(logits, axis=1)


if __name__ == "__main__":
    # Shapes implied by the module: input_size = CountVectorizer vocab (pick 16),
    # hidden = 8 (fixed in __init__), num_classes = 5 distinct intent labels.
    B, D_IN, H, C = 8, 16, 8, 5

    key = jax.random.PRNGKey(0)
    kx, kw1, kb1, kw2, kb2 = jax.random.split(key, 5)

    x = jax.random.normal(kx, (B, D_IN), dtype=jnp.float32)
    w1 = jax.random.normal(kw1, (D_IN, H), dtype=jnp.float32) * 0.1   # fc1.weight.T
    b1 = jax.random.normal(kb1, (H,), dtype=jnp.float32) * 0.1        # fc1.bias
    w2 = jax.random.normal(kw2, (H, C), dtype=jnp.float32) * 0.1      # fc2.weight.T
    b2 = jax.random.normal(kb2, (C,), dtype=jnp.float32) * 0.1        # fc2.bias

    # --- small-batch f32 run (matches the PyTorch module; exact softmax) ----
    out = jax.block_until_ready(
        intent_classifier_forward(x, w1, b1, w2, b2, out_dtype=jnp.float32))
    ref = reference_forward(x, w1, b1, w2, b2)
    assert out.shape == (B, C)
    assert jnp.allclose(out, ref, atol=1e-4, rtol=1e-4)
    assert jnp.allclose(jnp.sum(out, axis=1), 1.0, atol=1e-4)

    # --- larger batch: multi-step pipelined grid (tm=2048, grid=(2,)), bf16
    #     resident weights and bf16 output (default out_dtype). ---------------
    Bb = 4096
    xb = jax.random.normal(jax.random.PRNGKey(1), (Bb, D_IN), dtype=jnp.float32)
    out_b = jax.block_until_ready(
        intent_classifier_forward(xb, w1, b1, w2, b2,
                                  block_rows=4096,
                                  compute_dtype=jnp.bfloat16))
    ref_b = reference_forward(xb, w1, b1, w2, b2)
    assert out_b.shape == (Bb, C)
    assert out_b.dtype == jnp.bfloat16
    assert jnp.allclose(out_b.astype(jnp.float32), ref_b, atol=2e-2, rtol=2e-2)
    assert jnp.allclose(jnp.sum(out_b.astype(jnp.float32), axis=1), 1.0, atol=2e-2)

    print("KERNEL_OK")
</pallas_src>

<mosaic_0001>
module attributes {stable_mosaic.version = 11 : i64} {
  func.func @_intent_kernel(%arg0: i32, %arg1: memref<8x16xf32, #tpu.memory_space<vmem>>, %arg2: memref<16x128xf32, #tpu.memory_space<vmem>>, %arg3: memref<1x128xf32, #tpu.memory_space<vmem>>, %arg4: memref<128x128xf32, #tpu.memory_space<vmem>>, %arg5: memref<1x128xf32, #tpu.memory_space<vmem>>, %arg6: memref<8x128xf32, #tpu.memory_space<vmem>>) attributes {dimension_semantics = [#tpu.dimension_semantics<parallel>], iteration_bounds = array<i64: 1>, scalar_prefetch = 0 : i64, scratch_operands = 0 : i64, tpu.core_type = #tpu.core_type<tc>, window_params = [{transform_indices = @transform_0, window_bounds = array<i64: 8, 16>}, {pipeline_mode = #tpu.pipeline_mode<synchronous>, transform_indices = @transform_1, window_bounds = array<i64: 16, 128>}, {pipeline_mode = #tpu.pipeline_mode<synchronous>, transform_indices = @transform_2, window_bounds = array<i64: 1, 128>}, {pipeline_mode = #tpu.pipeline_mode<synchronous>, transform_indices = @transform_3, window_bounds = array<i64: 128, 128>}, {pipeline_mode = #tpu.pipeline_mode<synchronous>, transform_indices = @transform_4, window_bounds = array<i64: 1, 128>}, {transform_indices = @transform_5, window_bounds = array<i64: 8, 128>}]} {
    %c0 = arith.constant 0 : index
    %c0_0 = arith.constant 0 : index
    %0 = vector.load %arg1[%c0, %c0_0] : memref<8x16xf32, #tpu.memory_space<vmem>>, vector<8x16xf32>
    %c0_1 = arith.constant 0 : index
    %c0_2 = arith.constant 0 : index
    %1 = vector.load %arg2[%c0_1, %c0_2] : memref<16x128xf32, #tpu.memory_space<vmem>>, vector<16x128xf32>
    %cst = arith.constant dense<0.000000e+00> : vector<8x128xf32>
    %2 = tpu.matmul %0, %1, %cst {dimension_numbers = #tpu.dot_dimension_numbers<[1], [0], [0], [1], [0, 0, 1, 1], [], []>} : vector<8x16xf32>, vector<16x128xf32>, vector<8x128xf32> -> vector<8x128xf32>
    %c0_3 = arith.constant 0 : index
    %c0_4 = arith.constant 0 : index
    %3 = vector.load %arg3[%c0_3, %c0_4] : memref<1x128xf32, #tpu.memory_space<vmem>>, vector<1x128xf32>
    %4 = vector.broadcast %3 : vector<1x128xf32> to vector<8x128xf32>
    %5 = arith.addf %2, %4 : vector<8x128xf32>
    %cst_5 = arith.constant 0.000000e+00 : f32
    %6 = vector.broadcast %cst_5 : f32 to vector<8x128xf32>
    %7 = arith.maximumf %5, %6 : vector<8x128xf32>
    %c0_6 = arith.constant 0 : index
    %c0_7 = arith.constant 0 : index
    %8 = vector.load %arg4[%c0_6, %c0_7] : memref<128x128xf32, #tpu.memory_space<vmem>>, vector<128x128xf32>
    %cst_8 = arith.constant dense<0.000000e+00> : vector<8x128xf32>
    %9 = tpu.matmul %7, %8, %cst_8 {dimension_numbers = #tpu.dot_dimension_numbers<[1], [0], [0], [1], [0, 0, 1, 1], [], []>} : vector<8x128xf32>, vector<128x128xf32>, vector<8x128xf32> -> vector<8x128xf32>
    %c0_9 = arith.constant 0 : index
    %c0_10 = arith.constant 0 : index
    %10 = vector.load %arg5[%c0_9, %c0_10] : memref<1x128xf32, #tpu.memory_space<vmem>>, vector<1x128xf32>
    %11 = vector.broadcast %10 : vector<1x128xf32> to vector<8x128xf32>
    %12 = arith.addf %9, %11 : vector<8x128xf32>
    %cst_11 = arith.constant dense<0xFF800000> : vector<8xf32>
    %13 = vector.multi_reduction <maximumf>, %12, %cst_11 [1] : vector<8x128xf32> to vector<8xf32>
    %14 = vector.shape_cast %13 : vector<8xf32> to vector<8x1xf32>
    %15 = vector.broadcast %14 : vector<8x1xf32> to vector<8x128xf32>
    %16 = arith.subf %12, %15 : vector<8x128xf32>
    %17 = math.exp %16 : vector<8x128xf32>
    %cst_12 = arith.constant dense<0.000000e+00> : vector<8xf32>
    %18 = vector.multi_reduction <add>, %17, %cst_12 [1] : vector<8x128xf32> to vector<8xf32>
    %19 = vector.shape_cast %18 : vector<8xf32> to vector<8x1xf32>
    %20 = vector.broadcast %19 : vector<8x1xf32> to vector<8x128xf32>
    %21 = arith.divf %17, %20 : vector<8x128xf32>
    %c0_13 = arith.constant 0 : index
    %c0_14 = arith.constant 0 : index
    %22 = vector.load %arg6[%c0_13, %c0_14] : memref<8x128xf32, #tpu.memory_space<vmem>>, vector<8x128xf32>
    tpu.vector_store %arg6[%c0_13, %c0_14], %21 {strides = array<i32>} : memref<8x128xf32, #tpu.memory_space<vmem>>, vector<8x128xf32>,
    return
  }
  func.func @transform_0(%arg0: i32) -> (i32, i32) {
    %c0_i32 = arith.constant 0 : i32
    %c0_i32_0 = arith.constant 0 : i32
    return %arg0, %c0_i32 : i32, i32
  }
  func.func @transform_1(%arg0: i32) -> (i32, i32) {
    %c0_i32 = arith.constant 0 : i32
    %c0_i32_0 = arith.constant 0 : i32
    %c0_i32_1 = arith.constant 0 : i32
    return %c0_i32, %c0_i32_0 : i32, i32
  }
  func.func @transform_2(%arg0: i32) -> (i32, i32) {
    %c0_i32 = arith.constant 0 : i32
    %c0_i32_0 = arith.constant 0 : i32
    %c0_i32_1 = arith.constant 0 : i32
    return %c0_i32, %c0_i32_0 : i32, i32
  }
  func.func @transform_3(%arg0: i32) -> (i32, i32) {
    %c0_i32 = arith.constant 0 : i32
    %c0_i32_0 = arith.constant 0 : i32
    %c0_i32_1 = arith.constant 0 : i32
    return %c0_i32, %c0_i32_0 : i32, i32
  }
  func.func @transform_4(%arg0: i32) -> (i32, i32) {
    %c0_i32 = arith.constant 0 : i32
    %c0_i32_0 = arith.constant 0 : i32
    %c0_i32_1 = arith.constant 0 : i32
    return %c0_i32, %c0_i32_0 : i32, i32
  }
  func.func @transform_5(%arg0: i32) -> (i32, i32) {
    %c0_i32 = arith.constant 0 : i32
    %c0_i32_0 = arith.constant 0 : i32
    return %arg0, %c0_i32 : i32, i32
  }
}

</mosaic_0001>

<llo_original>
// kernel: intent_classifier_forward.1
$region0: #{intent_classifier_forward.1}
  #allocation0 [shape = 'u32[]', space=smem, size = 0x4, offset = 0x4, fixed_abs, tag = 'smem constant byte address 0x4 - core index']
  #allocation1 [shape = 'u32[72,128]{1,0:T(1,128)}', space=vmem, size = 0x9000, scoped, tag = 'internal scratch']
  %s0 = inlined_call_operand.vmem [shape: f32[8,16], index: 0, kind: input, shape index: {}]
  %s1 = inlined_call_operand.vmem [shape: f32[16,128], index: 1, kind: input, shape index: {}]
  %s2 = inlined_call_operand.vmem [shape: f32[1,128], index: 2, kind: input, shape index: {}]
  %s3 = inlined_call_operand.vmem [shape: f32[128,128], index: 3, kind: input, shape index: {}]
  %s4 = inlined_call_operand.vmem [shape: f32[1,128], index: 4, kind: input, shape index: {}]
  %s5 = inlined_call_operand.hbm [shape: f32[8,128], index: 5, kind: output, shape index: {}]
  %s6 = sld [smem:[#allocation0]]
  $region30: #{intent_classifier_forward.1} parent=0
    _
  %s8 = ssub.s32 1, %s6
  %s9 = scalar_select 0, %s8, %s6
  $region1: #{intent_classifier_forward.1} parent=0
    #allocation2 [shape = 'u8[4096]{0}', space=vmem, size = 0x1000, scoped, tag = 'output window, operand 0, single buffered']
    #allocation3 [shape = 's32[1]{0}', space=sflag, size = 0x4, scoped, tag = 'scoped memory for intent_classifier_forward.1']
    %10 = vsyncpa [#allocation3], 0
    // Predicated region
    $region2: #{intent_classifier_forward.1} parent=1 // pred_check
      _
    $region3: #{intent_classifier_forward.1} parent=1 // pred_check_branch
      %12 = sbr.rel (0) target = $region5
    $region4: #{intent_classifier_forward.1} parent=1 // pred_region
      _
    $region5: #{intent_classifier_forward.1} parent=1 // pred_fallthru
      _
    // Predicated region
    $region6: #{intent_classifier_forward.1} parent=1 // pred_check
      _
    $region7: #{intent_classifier_forward.1} parent=1 // pred_check_branch
      %14 = sbr.rel (0) target = $region9
    $region8: #{intent_classifier_forward.1} parent=1 // pred_region
      _
    $region9: #{intent_classifier_forward.1} parent=1 // pred_fallthru
      _
    // Predicated region
    $region10: #{intent_classifier_forward.1} parent=1 // pred_check
      _
    $region11: #{intent_classifier_forward.1} parent=1 // pred_check_branch
      %16 = sbr.rel (0) target = $region13
    $region12: #{intent_classifier_forward.1} parent=1 // pred_region
      _
    $region13: #{intent_classifier_forward.1} parent=1 // pred_fallthru
      _
    // Predicated region
    $region14: #{intent_classifier_forward.1} parent=1 // pred_check
      _
    $region15: #{intent_classifier_forward.1} parent=1 // pred_check_branch
      %18 = sbr.rel (0) target = $region17
    $region16: #{intent_classifier_forward.1} parent=1 // pred_region
      _
    $region17: #{intent_classifier_forward.1} parent=1 // pred_fallthru
      _
    // Predicated region
    $region18: #{intent_classifier_forward.1} parent=1 // pred_check
      _
    $region19: #{intent_classifier_forward.1} parent=1 // pred_check_branch
      %20 = sbr.rel (0) target = $region21
    $region20: #{intent_classifier_forward.1} parent=1 // pred_region
      _
    $region21: #{intent_classifier_forward.1} parent=1 // pred_fallthru
      _
    %v21 = vld [vmem:[%s0] sm:$0xff]
    %v22 = vld [vmem:[%s1] sm:$0xff]
    %v23 = vld [vmem:[%s1 + $0x8] sm:$0xff]
    %v24 = vld [vmem:[%s2] sm:$0x1]
    %v26 = vperm.slane %v24, 0
    %vm28 = vcmask 130048
    %v30 = vsel %vm28, %v21, 0
    %32 = vmatpush.msra.mxu0 0.0
    %33 = vmatpush.msra.mxu0 0.0
    %34 = vmatpush.msra.mxu0 0.0
    %35 = vmatpush.msra.mxu0 0.0
    %36 = vmatpush.msra.mxu0 0.0
    %37 = vmatpush.msra.mxu0 0.0
    %38 = vmatpush.msra.mxu0 0.0
    %39 = vmatpush.msra.mxu0 0.0
    %40 = vmatpush.msra.mxu0 0.0
    %41 = vmatpush.msra.mxu0 0.0
    %42 = vmatpush.msra.mxu0 0.0
    %43 = vmatpush.msra.mxu0 0.0
    %44 = vmatpush.msra.mxu0 0.0
    %45 = vmatpush.msra.mxu0 0.0
    %46 = vmatpush.msra.mxu0 %v23
    %47 = vmatpush.msra.mxu0 %v22
    %48 = vmatmul.f32.gmra.mxu0 %v30
    %v49 = vpop.f32.mrf.mxu0
    %v50 = vadd.f32 %v26, %v49
    %51 = vdwg.mxu0
    %v52 = vmax.f32 %v50, 0.0
    %v53 = vld [vmem:[%s3] sm:$0xff]
    %v54 = vld [vmem:[%s3 + $0x8] sm:$0xff]
    %v55 = vld [vmem:[%s3 + $0x10] sm:$0xff]
    %v56 = vld [vmem:[%s3 + $0x18] sm:$0xff]
    %v57 = vld [vmem:[%s3 + $0x20] sm:$0xff]
    %v58 = vld [vmem:[%s3 + $0x28] sm:$0xff]
    %v59 = vld [vmem:[%s3 + $0x30] sm:$0xff]
    %v60 = vld [vmem:[%s3 + $0x38] sm:$0xff]
    %v61 = vld [vmem:[%s3 + $0x40] sm:$0xff]
    %v62 = vld [vmem:[%s3 + $0x48] sm:$0xff]
    %v63 = vld [vmem:[%s3 + $0x50] sm:$0xff]
    %v64 = vld [vmem:[%s3 + $0x58] sm:$0xff]
    %v65 = vld [vmem:[%s3 + $0x60] sm:$0xff]
    %v66 = vld [vmem:[%s3 + $0x68] sm:$0xff]
    %v67 = vld [vmem:[%s3 + $0x70] sm:$0xff]
    %v68 = vld [vmem:[%s3 + $0x78] sm:$0xff]
    %v69 = vld [vmem:[%s4] sm:$0x1]
    %v71 = vperm.slane %v69, 0
    %73 = vmatpush.msra.mxu0 %v68
    %74 = vmatpush.msra.mxu0 %v67
    %75 = vmatpush.msra.mxu0 %v66
    %76 = vmatpush.msra.mxu0 %v65
    %77 = vmatpush.msra.mxu0 %v64
    %78 = vmatpush.msra.mxu0 %v63
    %79 = vmatpush.msra.mxu0 %v62
    %80 = vmatpush.msra.mxu0 %v61
    %81 = vmatpush.msra.mxu0 %v60
    %82 = vmatpush.msra.mxu0 %v59
    %83 = vmatpush.msra.mxu0 %v58
    %84 = vmatpush.msra.mxu0 %v57
    %85 = vmatpush.msra.mxu0 %v56
    %86 = vmatpush.msra.mxu0 %v55
    %87 = vmatpush.msra.mxu0 %v54
    %88 = vmatpush.msra.mxu0 %v53
    %89 = vmatmul.f32.gmra.mxu0 %v52
    %v90 = vpop.f32.mrf.mxu0
    %v91 = vadd.f32 %v71, %v90
    %92 = vdwg.mxu0
    %93 = vmax.xlane.f32.xlu0 %v91
    %v94 = vpop.xlane.xlu0 %93
    %v95 = vsub.f32 %v91, %v94
    %v96 = vmul.f32 %v95, 1.442695
    %v97 = vpow.pop %v96
    %98 = vadd.xlane.f32.xlu0 %v97
    %v99 = vpop.xlane.xlu0 %98
    %v100 = vrcp.pop %v99
    %v101 = vmul.f32 %v99, %v100
    %v102 = vsub.f32 1.0, %v101
    %v103 = vmul.f32 %v100, %v102
    %v104 = vadd.f32 %v100, %v103
    %vm105 = vweird.f32 %v99
    %vm106 = vweird.f32 %v100
    %vm107 = vmor %vm105, %vm106
    %v108 = vsel %vm107, %v100, %v104
    %v109 = vand.u32 2147483647, %v99
    %vm110 = vcmp.eq.f32.partialorder %v109, 8.507059e+37
    %v111 = vand.u32 %v99, 2147483648
    %v112 = vor.u32 1.1754944e-38, %v111
    %v113 = vsel %vm110, %v112, %v108
    %v114 = vmul.f32 %v97, %v113
    %115 = vst [vmem:[#allocation2] sm:$0xff] %v114
    // Predicated region
    $region22: #{intent_classifier_forward.1} parent=1 // pred_check
      _
    $region23: #{intent_classifier_forward.1} parent=1 // pred_check_branch
      %117 = sbr.rel (0) target = $region25
    $region24: #{intent_classifier_forward.1} parent=1 // pred_region
      %119 = vsyncadd [#allocation3], 0
      %s121 = sshll.u32 [#allocation2], 4
      %s122 = int_to_ptr.vmem [resolvable:$true] %s121
      %s123 = sshll.u32 %s5, 4
      %s124 = int_to_ptr.hbm [resolvable:$true] %s123
      %126 = dma.vmem_to_hbm [thread:$0]  %s122, 128, %s124, [#allocation3]
    $region25: #{intent_classifier_forward.1} parent=1 // pred_fallthru
      _
    // Predicated region
    $region26: #{intent_classifier_forward.1} parent=1 // pred_check
      _
    $region27: #{intent_classifier_forward.1} parent=1 // pred_check_branch
      %128 = sbr.rel (0) target = $region29
    $region28: #{intent_classifier_forward.1} parent=1 // pred_region
      %130 = dma.done [#allocation3], 128
    $region29: #{intent_classifier_forward.1} parent=1 // pred_fallthru
      _
    %131 = vsyncpa [#allocation3], 1

</llo_original>
